<compile_context>
chip_gen: v7x
topology: tpu7x:2x2x1
jax: 0.10.0
libtpu: 0.0.40
codegen_flags: <defaults>
</compile_context>

<pallas_src>
import jax
import jax.numpy as jnp
from jax.experimental import pallas as pl
from jax.experimental.pallas import tpu as pltpu


def _copy_kernel(xg_ref, o_ref):
    # attn = softmax over a size-1 axis = 1.0 exactly, so the forward is the
    # identity on x_gcn (bit-exact match to the PyTorch forward for finite inputs).
    o_ref[...] = xg_ref[...]


def _fusion_kernel(xg_ref, xl_ref, w_ref, b_ref, o_ref):
    xg = xg_ref[...]                                   # (TB, D)
    xl = xl_ref[...]                                   # (TB, D)
    D = xg.shape[-1]

    # nn.Linear(2D, 1) on the concatenation [xg | xl], computed as a VPU multiply
    # plus a lane reduction (out_features == 1 would waste 127/128 of the MXU):
    #   logits[b] = sum_k xg[b,k]*W[0,k] + sum_k xl[b,k]*W[0,D+k] + bias
    wg = w_ref[:, :D]                                  # (1, D) static lane-aligned view
    wl = w_ref[:, D:]                                  # (1, D)
    logits = jnp.sum(xg * wg + xl * wl, axis=-1, keepdims=True) + b_ref[0]   # (TB, 1)

    # softmax over the last axis of `logits` (extent 1): exp/normalize kept for
    # structural fidelity; reciprocal goes to the otherwise-idle EUP slot.
    e = jnp.exp(logits - logits)                       # exp(x - max(x, -1)) == 1
    denom = jnp.sum(e, axis=-1, keepdims=True)
    attn = e * pl.reciprocal(denom, approx=True)       # == 1.0               (TB, 1)

    # Faithful two-multiply blend (matches PyTorch numerics; no cancellation).
    o_ref[...] = xg * attn + xl * (1.0 - attn)


def _choose_block_b(B, block_b):
    """Batch tile that (a) respects the (8, 128) sublane rule and (b) yields >= 4
    grid steps when possible so both v7x TensorCores get work under
    dimension_semantics=("parallel",)."""
    if B <= 8 or B % 8 != 0:
        return B                              # single full-extent block (always legal)
    target = pl.cdiv(B, 4)                    # aim for >= 4 grid steps
    target = ((target + 7) // 8) * 8          # round up to a sublane multiple
    return max(8, min(block_b, target))


def gcn_attention_fusion(x_gcn, x_label, weight, bias, *,
                         block_b=1024, compute_attention=False):
    """Forward pass of GCNWithAttentionFusion.

    x_gcn, x_label : (B, D) float32 with D = 768
    weight         : (1, 2*D) float32  -- nn.Linear(2D, 1).weight (PyTorch layout)
    bias           : (1,)    float32   -- nn.Linear(2D, 1).bias
    compute_attention=False (default): exploit attn == 1.0 and stream only x_gcn.
    compute_attention=True : structurally faithful Linear + softmax + blend path.
    """
    B, D = x_gcn.shape
    assert x_label.shape == (B, D)
    assert weight.shape == (1, 2 * D)
    assert bias.shape == (1,)

    tb = _choose_block_b(B, block_b)
    grid = (pl.cdiv(B, tb),)
    row_spec = pl.BlockSpec((tb, D), lambda i: (i, 0))
    compiler_params = pltpu.CompilerParams(
        dimension_semantics=("parallel",),          # megacore shards batch tiles
        vmem_limit_bytes=32 * 1024 * 1024,          # fits v5e scoped / v7x physical
    )

    if not compute_attention:
        # Fast path: out = x_gcn exactly. 2 HBM streams (read x_gcn, write out).
        cost = pl.CostEstimate(flops=0, transcendentals=0,
                               bytes_accessed=2 * B * D * 4)
        return pl.pallas_call(
            _copy_kernel,
            out_shape=jax.ShapeDtypeStruct((B, D), x_gcn.dtype),
            grid_spec=pltpu.PrefetchScalarGridSpec(
                num_scalar_prefetch=0,
                grid=grid,
                in_specs=[row_spec],                # x_gcn only; x_label is dead
                out_specs=row_spec,
            ),
            compiler_params=compiler_params,
            cost_estimate=cost,
        )(x_gcn)

    # Structurally faithful path: Linear(1536, 1) + softmax + blend.
    cost = pl.CostEstimate(
        flops=8 * B * D,                            # dot-products + blend epilogue
        transcendentals=B,                          # one exp per row
        bytes_accessed=(3 * B * D + 2 * D + 1) * 4,
    )
    return pl.pallas_call(
        _fusion_kernel,
        out_shape=jax.ShapeDtypeStruct((B, D), x_gcn.dtype),
        grid_spec=pltpu.PrefetchScalarGridSpec(
            num_scalar_prefetch=0,
            grid=grid,
            in_specs=[
                row_spec,                                           # x_gcn   (streamed)
                row_spec,                                           # x_label (streamed)
                pl.BlockSpec((1, 2 * D), lambda i: (0, 0)),         # weight, VMEM-resident
                pl.BlockSpec(memory_space=pltpu.MemorySpace.SMEM),  # bias scalar
            ],
            out_specs=row_spec,
        ),
        compiler_params=compiler_params,
        cost_estimate=cost,
    )(x_gcn, x_label, weight, bias)


def reference(x_gcn, x_label, weight, bias):
    combined = jnp.concatenate([x_gcn, x_label], axis=-1)       # (B, 2D)
    logits = combined @ weight.T + bias                         # (B, 1)
    attn = jax.nn.softmax(logits, axis=-1)                      # softmax over size-1 axis
    return x_gcn * attn + x_label * (1.0 - attn)


if __name__ == "__main__":
    B = 64            # small demo batch
    D = 768           # fixed by nn.Linear(768 + 768, 1)

    key = jax.random.PRNGKey(0)
    k1, k2, k3, k4 = jax.random.split(key, 4)

    x_gcn = jax.random.normal(k1, (B, D), dtype=jnp.float32)
    x_label = jax.random.normal(k2, (B, D), dtype=jnp.float32)

    # PyTorch-style init for nn.Linear(2*D, 1): U(-1/sqrt(fan_in), 1/sqrt(fan_in)).
    bound = 1.0 / jnp.sqrt(jnp.float32(2 * D))
    weight = jax.random.uniform(k3, (1, 2 * D), jnp.float32, -bound, bound)
    bias = jax.random.uniform(k4, (1,), jnp.float32, -bound, bound)

    ref = reference(x_gcn, x_label, weight, bias)

    # Fast path (default): tb=16 here -> grid=(4,), pipelined + megacore-friendly.
    out_fast = jax.block_until_ready(
        gcn_attention_fusion(x_gcn, x_label, weight, bias))
    assert out_fast.shape == (B, D)
    assert jnp.allclose(out_fast, ref, atol=1e-5, rtol=1e-5), "fast path mismatch"

    # Structurally faithful path (Linear + softmax + blend): same values.
    out_full = jax.block_until_ready(
        gcn_attention_fusion(x_gcn, x_label, weight, bias, compute_attention=True))
    assert jnp.allclose(out_full, ref, atol=1e-5, rtol=1e-5), "full path mismatch"

    print("KERNEL_OK")
</pallas_src>

<mosaic_0001>
module attributes {stable_mosaic.version = 11 : i64} {
  func.func @_copy_kernel(%arg0: i32, %arg1: memref<16x768xf32, #tpu.memory_space<vmem>>, %arg2: memref<16x768xf32, #tpu.memory_space<vmem>>) attributes {dimension_semantics = [#tpu.dimension_semantics<parallel>], iteration_bounds = array<i64: 4>, scalar_prefetch = 0 : i64, scratch_operands = 0 : i64, tpu.core_type = #tpu.core_type<tc>, window_params = [{transform_indices = @transform_0, window_bounds = array<i64: 16, 768>}, {transform_indices = @transform_1, window_bounds = array<i64: 16, 768>}]} {
    %c0 = arith.constant 0 : index
    %c0_0 = arith.constant 0 : index
    %0 = vector.load %arg1[%c0, %c0_0] : memref<16x768xf32, #tpu.memory_space<vmem>>, vector<16x768xf32>
    %c0_1 = arith.constant 0 : index
    %c0_2 = arith.constant 0 : index
    %1 = vector.load %arg2[%c0_1, %c0_2] : memref<16x768xf32, #tpu.memory_space<vmem>>, vector<16x768xf32>
    tpu.vector_store %arg2[%c0_1, %c0_2], %0 {strides = array<i32>} : memref<16x768xf32, #tpu.memory_space<vmem>>, vector<16x768xf32>,
    return
  }
  func.func @transform_0(%arg0: i32) -> (i32, i32) {
    %c0_i32 = arith.constant 0 : i32
    %c0_i32_0 = arith.constant 0 : i32
    return %arg0, %c0_i32 : i32, i32
  }
  func.func @transform_1(%arg0: i32) -> (i32, i32) {
    %c0_i32 = arith.constant 0 : i32
    %c0_i32_0 = arith.constant 0 : i32
    return %arg0, %c0_i32 : i32, i32
  }
}

</mosaic_0001>

<llo_original>
// kernel: tpu_custom_call.1
$region0: #{tpu_custom_call.1}
  #allocation0 [shape = 'u32[]', space=smem, size = 0x4, offset = 0x4, fixed_abs, tag = 'smem constant byte address 0x4 - core index']
  #allocation1 [shape = 'u32[144,128]{1,0:T(1,128)}', space=vmem, size = 0x12000, scoped, tag = 'internal scratch']
  %s0 = inlined_call_operand.hbm [shape: f32[64,768], index: 0, kind: input, shape index: {}]
  %s1 = inlined_call_operand.hbm [shape: f32[64,768], index: 1, kind: output, shape index: {}]
  %s2 = sld [smem:[#allocation0]]
  $region41: #{tpu_custom_call.1} parent=0
    _
  %s4 = ssub.s32 1, %s2
  %s5 = scalar_select 0, %s4, %s2
  $region1: #{tpu_custom_call.1} parent=0
    #allocation2 [shape = 'u8[98304]{0}', space=vmem, size = 0x18000, scoped, tag = 'input window, operand 0']
    #allocation3 [shape = 's32[2]{0}', space=sflag, size = 0x8, scoped, tag = 'scoped memory for tpu_custom_call.1']
    #allocation4 [shape = 's32[2]{0}', space=sflag, size = 0x8, scoped, tag = 'scoped memory for tpu_custom_call.1']
    #allocation5 [shape = 'u8[98304]{0}', space=vmem, size = 0x18000, scoped, tag = 'output window, operand 0']
    %6 = vsyncpa [#allocation3], 0
    %s7 = scalar_lea.sflag [#allocation3], 1
    %8 = vsyncpa %s7, 0
    %9 = vsyncpa [#allocation4], 0
    %s10 = scalar_lea.sflag [#allocation4], 1
    %11 = vsyncpa %s10, 0
    loop: start=0, step=1, limit=6
    $region2: #{tpu_custom_call.1} parent=1 // loop_pre_header
      _
    $region3: #{tpu_custom_call.1} parent=1 // loop_header
      %s13 = sphi 0, %s17
      %p14 = scmp.ge.s32.totalorder %s13, 6
      %s23 = sphi 0, %s25
      %s26 = sphi 0, %s23
      %s27 = sphi 0, %s26
      %s43 = sphi 0, %s27
      %s49 = sphi 0, %s51
      %s52 = sphi 0, %s49
      %s53 = sphi 0, %s52
      %s69 = sphi 0, %s53
    $region4: #{tpu_custom_call.1} parent=1 // loop_header_branch
      %16 = sbr.rel (%p14) target = $region8
    $region5: #{tpu_custom_call.1} parent=1 // loop_body
      %s18 = ssub.s32 %s13, 1
      %s19 = ssub.s32 %s13, 2
      %s20 = sadd.s32 %s13, 1
      %s21 = ssub.s32 %s13, %s20
      %p22 = scmp.eq.s32.totalorder %s21, 0
      %s24 = sadd.s32 %s23, 1
      %s25 = scalar_select %p22, %s23, %s24
      %p28 = pneg %p22
      %p29 = scmp.eq.s32.totalorder %s13, 3
      %p30 = por %p28, %p29
      %p31 = scmp.ne.s32.totalorder %s23, %s26
      %p32 = scmp.eq.s32.totalorder %s13, 0
      %p33 = por %p31, %p32
      %p34 = scmp.ne.s32.totalorder %s23, %s26
      %p35 = scmp.eq.s32.totalorder %s18, 3
      %p36 = por %p34, %p35
      %p37 = scmp.ne.s32.totalorder %s26, %s27
      %p38 = scmp.eq.s32.totalorder %s18, 0
      %p39 = por %p37, %p38
      %p40 = scmp.ne.s32.totalorder %s26, %s27
      %p41 = scmp.eq.s32.totalorder %s19, 3
      %p42 = por %p40, %p41
      %p44 = scmp.ne.s32.totalorder %s27, %s43
      %p45 = scmp.eq.s32.totalorder %s19, 0
      %p46 = por %p44, %p45
      %s47 = ssub.s32 %s13, %s20
      %p48 = scmp.eq.s32.totalorder %s47, 0
      %s50 = sadd.s32 %s49, 1
      %s51 = scalar_select %p48, %s49, %s50
      %p54 = pneg %p48
      %p55 = scmp.eq.s32.totalorder %s13, 3
      %p56 = por %p54, %p55
      %p57 = scmp.ne.s32.totalorder %s49, %s52
      %p58 = scmp.eq.s32.totalorder %s13, 0
      %p59 = por %p57, %p58
      %p60 = scmp.ne.s32.totalorder %s49, %s52
      %p61 = scmp.eq.s32.totalorder %s18, 3
      %p62 = por %p60, %p61
      %p63 = scmp.ne.s32.totalorder %s52, %s53
      %p64 = scmp.eq.s32.totalorder %s18, 0
      %p65 = por %p63, %p64
      %p66 = scmp.ne.s32.totalorder %s52, %s53
      %p67 = scmp.eq.s32.totalorder %s19, 3
      %p68 = por %p66, %p67
      %p70 = scmp.ne.s32.totalorder %s53, %s69
      %p71 = scmp.eq.s32.totalorder %s19, 0
      %p72 = por %p70, %p71
      %p73 = scmp.le.s32.totalorder 1, %s13
      %p74 = scmp.lt.s32.totalorder %s13, 5
      %p75 = pnand %p73, %p74
      %p76 = pneg %p75
      // Predicated region
      $region9: #{tpu_custom_call.1} parent=5 // pred_check
        _
      $region10: #{tpu_custom_call.1} parent=5 // pred_check_branch
        %78 = sbr.rel (%p75) target = $region12
      $region11: #{tpu_custom_call.1} parent=5 // pred_region
        %s79 = ssub.s32 %s13, 1
      $region12: #{tpu_custom_call.1} parent=5 // pred_fallthru
        _
      %p80 = scmp.lt.s32.totalorder %s13, 4
      // Predicated region
      $region13: #{tpu_custom_call.1} parent=5 // pred_check
        %p81 = pneg %p80
      $region14: #{tpu_custom_call.1} parent=5 // pred_check_branch
        %83 = sbr.rel (%p81) target = $region16
      $region15: #{tpu_custom_call.1} parent=5 // pred_region
        // Predicated region
        $region17: #{tpu_custom_call.1} parent=15 // pred_check
          %p84 = pneg %p33
        $region18: #{tpu_custom_call.1} parent=15 // pred_check_branch
          %86 = sbr.rel (%p84) target = $region20
        $region19: #{tpu_custom_call.1} parent=15 // pred_region
          %s87 = sand.u32 %s23, 1
          %s88 = scalar_lea.sflag [#allocation3], %s87
          %s89 = sand.u32 %s23, 1
          %s90 = smul.addr %s89, 96
          %s91 = scalar_lea.vmem [#allocation2], %s90
          %s92 = smul.u32 2, %s13
          %s94 = ssub.s32 1536, 1536
          %95 = vsyncadd %s88, %s94
          %s96 = smul.addr %s92, 6
          %s97 = smul.addr %s96, 128
          %s98 = scalar_lea.hbm %s0, %s97
          %s99 = sshll.u32 %s91, 4
          %s100 = int_to_ptr.vmem [resolvable:$true] %s99
          %105 = dma.hbm_to_vmem [thread:$0]  %s98, 1536, %s100, %s88, 768, 768, 48
        $region20: #{tpu_custom_call.1} parent=15 // pred_fallthru
          _
      $region16: #{tpu_custom_call.1} parent=5 // pred_fallthru
        _
      %p106 = scmp.le.s32.totalorder 1, %s13
      %p107 = scmp.lt.s32.totalorder %s13, 5
      %p108 = pnand %p106, %p107
      %p109 = pneg %p108
      // Predicated region
      $region21: #{tpu_custom_call.1} parent=5 // pred_check
        _
      $region22: #{tpu_custom_call.1} parent=5 // pred_check_branch
        %111 = sbr.rel (%p108) target = $region24
      $region23: #{tpu_custom_call.1} parent=5 // pred_region
        %s112 = ssub.s32 %s13, 1
        %s113 = sand.u32 %s26, 1
        %s114 = scalar_lea.sflag [#allocation3], %s113
        %s115 = sand.u32 %s26, 1
        %s116 = smul.addr %s115, 96
        %s117 = scalar_lea.vmem [#allocation2], %s116
        // Predicated region
        $region25: #{tpu_custom_call.1} parent=23 // pred_check
          %p118 = pneg %p39
        $region26: #{tpu_custom_call.1} parent=23 // pred_check_branch
          %120 = sbr.rel (%p118) target = $region28
        $region27: #{tpu_custom_call.1} parent=23 // pred_region
          %121 = dma.done %s114, 1536
        $region28: #{tpu_custom_call.1} parent=23 // pred_fallthru
          _
        %s122 = sand.u32 %s26, 1
        %s123 = scalar_lea.sflag [#allocation3], %s122
        %s124 = sand.u32 %s26, 1
        %s125 = smul.addr %s124, 96
        %s126 = scalar_lea.vmem [#allocation2], %s125
        %p127 = pneg %p39
        %p128 = pneg %p36
        %p129 = pneg %p65
        %p130 = pneg %p62
        %s131 = sand.u32 %s52, 1
        %s132 = scalar_lea.sflag [#allocation4], %s131
        %s133 = sand.u32 %s52, 1
        %s134 = smul.addr %s133, 96
        %s135 = scalar_lea.vmem [#allocation5], %s134
        %s136 = smul.u32 2, %s18
        %s137 = smul.u32 2, %s18
        %v138 = vld [vmem:[%s117] sm:$0xff]
        %v139 = vld [vmem:[%s117 + $0x8] sm:$0xff]
        %v140 = vld [vmem:[%s117 + $0x10] sm:$0xff]
        %v141 = vld [vmem:[%s117 + $0x18] sm:$0xff]
        %v142 = vld [vmem:[%s117 + $0x20] sm:$0xff]
        %v143 = vld [vmem:[%s117 + $0x28] sm:$0xff]
        %v144 = vld [vmem:[%s117 + $0x30] sm:$0xff]
        %v145 = vld [vmem:[%s117 + $0x38] sm:$0xff]
        %v146 = vld [vmem:[%s117 + $0x40] sm:$0xff]
        %v147 = vld [vmem:[%s117 + $0x48] sm:$0xff]
        %v148 = vld [vmem:[%s117 + $0x50] sm:$0xff]
        %v149 = vld [vmem:[%s117 + $0x58] sm:$0xff]
        %150 = vst [vmem:[%s135] sm:$0xff] %v138
        %151 = vst [vmem:[%s135 + $0x8] sm:$0xff] %v139
        %152 = vst [vmem:[%s135 + $0x10] sm:$0xff] %v140
        %153 = vst [vmem:[%s135 + $0x18] sm:$0xff] %v141
        %154 = vst [vmem:[%s135 + $0x20] sm:$0xff] %v142
        %155 = vst [vmem:[%s135 + $0x28] sm:$0xff] %v143
        %156 = vst [vmem:[%s135 + $0x30] sm:$0xff] %v144
        %157 = vst [vmem:[%s135 + $0x38] sm:$0xff] %v145
        %158 = vst [vmem:[%s135 + $0x40] sm:$0xff] %v146
        %159 = vst [vmem:[%s135 + $0x48] sm:$0xff] %v147
        %160 = vst [vmem:[%s135 + $0x50] sm:$0xff] %v148
        %161 = vst [vmem:[%s135 + $0x58] sm:$0xff] %v149
        %s162 = sand.u32 %s52, 1
        %s163 = scalar_lea.sflag [#allocation4], %s162
        %s164 = sand.u32 %s52, 1
        %s165 = smul.addr %s164, 96
        %s166 = scalar_lea.vmem [#allocation5], %s165
        // Predicated region
        $region29: #{tpu_custom_call.1} parent=23 // pred_check
          %p167 = pneg %p62
        $region30: #{tpu_custom_call.1} parent=23 // pred_check_branch
          %169 = sbr.rel (%p167) target = $region32
        $region31: #{tpu_custom_call.1} parent=23 // pred_region
          %s170 = smul.u32 2, %s18
          %s172 = ssub.s32 1536, 1536
          %173 = vsyncadd %s163, %s172
          %s174 = smul.addr %s170, 6
          %s175 = smul.addr %s174, 128
          %s176 = scalar_lea.hbm %s1, %s175
          %s177 = sshll.u32 %s166, 4
          %s178 = int_to_ptr.vmem [resolvable:$true] %s177
          %183 = dma.vmem_to_hbm [thread:$0]  %s178, 1536, %s176, %s163, 768, 768, 48
        $region32: #{tpu_custom_call.1} parent=23 // pred_fallthru
          _
      $region24: #{tpu_custom_call.1} parent=5 // pred_fallthru
        _
      %p184 = scmp.le.s32.totalorder 2, %s13
      // Predicated region
      $region33: #{tpu_custom_call.1} parent=5 // pred_check
        %p185 = pneg %p184
      $region34: #{tpu_custom_call.1} parent=5 // pred_check_branch
        %187 = sbr.rel (%p185) target = $region36
      $region35: #{tpu_custom_call.1} parent=5 // pred_region
        %s188 = ssub.s32 %s13, 2
        // Predicated region
        $region37: #{tpu_custom_call.1} parent=35 // pred_check
          %p189 = pneg %p68
        $region38: #{tpu_custom_call.1} parent=35 // pred_check_branch
          %191 = sbr.rel (%p189) target = $region40
        $region39: #{tpu_custom_call.1} parent=35 // pred_region
          %s192 = sand.u32 %s53, 1
          %s193 = scalar_lea.sflag [#allocation4], %s192
          %s194 = sand.u32 %s53, 1
          %s195 = smul.addr %s194, 96
          %s196 = scalar_lea.vmem [#allocation5], %s195
          %197 = dma.done %s193, 1536
        $region40: #{tpu_custom_call.1} parent=35 // pred_fallthru
          _
      $region36: #{tpu_custom_call.1} parent=5 // pred_fallthru
        _
    $region6: #{tpu_custom_call.1} parent=1 // loop_footer
      %s17 = sadd.s32 1, %s13
    $region7: #{tpu_custom_call.1} parent=1 // loop_footer_branch
      %12 = sbr.rel target = $region3
    $region8: #{tpu_custom_call.1} parent=1 // loop_exit
      _
    %198 = vsyncpa [#allocation3], 1
    %s199 = scalar_lea.sflag [#allocation3], 1
    %200 = vsyncpa %s199, 1
    %201 = vsyncpa [#allocation4], 1
    %s202 = scalar_lea.sflag [#allocation4], 1
    %203 = vsyncpa %s202, 1

</llo_original>
